<compile_context>
chip_gen: v7x
topology: tpu7x:2x2x1
jax: 0.10.0
libtpu: 0.0.40
codegen_flags: <defaults>
</compile_context>

<pallas_src>
import jax
import jax.numpy as jnp
from jax.experimental import pallas as pl
from jax.experimental.pallas import tpu as pltpu


def _round_up(x: int, m: int) -> int:
    return ((x + m - 1) // m) * m


def _vmem_limit_bytes(est_bytes: int):
    # Keep the per-generation scoped default when we comfortably fit it; otherwise
    # raise it explicitly, capped well below v7x's 64 MiB-per-core physical VMEM.
    if est_bytes <= (12 << 20):
        return None
    return int(min(est_bytes + (8 << 20), 56 << 20))


def _fused_vmem_estimate(n_pad: int, d_pad: int, t: int) -> int:
    return (
        2 * n_pad * d_pad * 4      # x0 input (f32), conservatively x2 buffers
        + 2 * n_pad * d_pad * 2    # xa + xb bf16 layer state (ping/pong)
        + n_pad * d_pad * 4        # f32 running layer-sum
        + t * d_pad * 4            # per row-block f32 accumulator
        + 2 * t * t * 2            # A tile (bf16) double-buffer
        + 2 * t * d_pad * 4        # output tile (f32) double-buffer
    )


def _layerwise_vmem_estimate(t: int, d_pad: int) -> int:
    return (
        2 * t * t * 2              # A tile double-buffer (bf16)
        + 2 * t * d_pad * 2        # X tile double-buffer (bf16)
        + 2 * t * d_pad * 4        # acc_in double-buffer (f32)
        + 2 * t * d_pad * 2        # xout double-buffer (bf16)
        + 2 * t * d_pad * 4        # acc_out double-buffer (f32)
        + t * d_pad * 4            # f32 scratch accumulator
    )


# --------------------------------------------------------------------------- #
# Normalized adjacency (cacheable — edge_index is static per graph)
# --------------------------------------------------------------------------- #
def build_normalized_adjacency(edge_index, num_nodes: int, n_pad: int):
    """Padded bf16 D^-1/2 A D^-1/2 (gcn_norm, no self-loops). Built directly in
    bf16 so no dense f32 (n_pad, n_pad) intermediate is ever materialized."""
    src = edge_index[0]
    dst = edge_index[1]
    deg = jnp.zeros((num_nodes,), jnp.float32).at[dst].add(1.0)
    dinv = jnp.where(deg > 0, jax.lax.rsqrt(jnp.maximum(deg, 1e-12)), 0.0)
    norm = (dinv[dst] * dinv[src]).astype(jnp.bfloat16)
    return jnp.zeros((n_pad, n_pad), jnp.bfloat16).at[dst, src].add(norm)


# --------------------------------------------------------------------------- #
# Fused-layer kernel: all propagation layers + mean in one pallas_call.
# X state and the layer-sum stay VMEM-resident; only A tiles stream from HBM.
# --------------------------------------------------------------------------- #
def _make_fused_kernel(n_layers: int, tm: int, tk: int):
    inv = 1.0 / float(n_layers + 1)

    def kernel(a_ref, x0_ref, out_ref, xa_sc, xb_sc, acc_sc, blk_sc):
        l = pl.program_id(0)
        m = pl.program_id(1)
        k = pl.program_id(2)
        nk = pl.num_programs(2)

        # One-time init: seed the resident X state and the layer-sum with x0.
        @pl.when((l == 0) & (m == 0) & (k == 0))
        def _():
            x0 = x0_ref[...]
            acc_sc[...] = x0
            xa_sc[...] = x0.astype(xa_sc.dtype)

        # Per-(layer, row-block) accumulator reset.
        @pl.when(k == 0)
        def _():
            blk_sc[...] = jnp.zeros_like(blk_sc)

        even = jax.lax.rem(l, 2) == 0          # even layers read xa, write xb
        odd = jnp.logical_not(even)
        koff = pl.multiple_of(k * tk, tk)
        # Select the current layer's X buffer (VMEM-local; the unused slice is
        # discarded by the select).
        xk = jnp.where(even, xa_sc[pl.ds(koff, tk), :], xb_sc[pl.ds(koff, tk), :])
        blk_sc[...] += jnp.dot(a_ref[...], xk, preferred_element_type=jnp.float32)

        last_k = k == nk - 1
        not_last_layer = l != pl.num_programs(0) - 1
        moff = pl.multiple_of(m * tm, tm)

        # Stash next-layer X (bf16 MXU operand). Skipped on the final layer —
        # it would never be read again (dead-write elimination).
        @pl.when(last_k & even & not_last_layer)
        def _():
            xb_sc[pl.ds(moff, tm), :] = blk_sc[...].astype(xb_sc.dtype)

        @pl.when(last_k & odd & not_last_layer)
        def _():
            xa_sc[pl.ds(moff, tm), :] = blk_sc[...].astype(xa_sc.dtype)

        # Update the running layer-sum and emit the running mean. Writebacks
        # happen in grid order, so only the final layer's value survives in HBM;
        # the separate XLA mean pass is folded into this epilogue.
        @pl.when(last_k)
        def _():
            acc_new = acc_sc[pl.ds(moff, tm), :] + blk_sc[...]
            acc_sc[pl.ds(moff, tm), :] = acc_new
            out_ref[...] = (acc_new * inv).astype(out_ref.dtype)

    return kernel


def _fused_forward(a_bf, x_pad, *, n_layers: int, t: int, n_pad: int, d_pad: int):
    grid = (n_layers, n_pad // t, n_pad // t)
    est = _fused_vmem_estimate(n_pad, d_pad, t)
    call = pl.pallas_call(
        _make_fused_kernel(n_layers, t, t),
        out_shape=jax.ShapeDtypeStruct((n_pad, d_pad), jnp.float32),
        grid_spec=pltpu.PrefetchScalarGridSpec(
            num_scalar_prefetch=0,
            grid=grid,
            in_specs=[
                pl.BlockSpec((t, t), lambda l, m, k: (m, k)),          # A tile (bf16)
                pl.BlockSpec((n_pad, d_pad), lambda l, m, k: (0, 0)),  # x0, loaded once
            ],
            out_specs=pl.BlockSpec((t, d_pad), lambda l, m, k: (m, 0)),
            scratch_shapes=[
                pltpu.VMEM((n_pad, d_pad), jnp.bfloat16),   # X state (ping)
                pltpu.VMEM((n_pad, d_pad), jnp.bfloat16),   # X state (pong)
                pltpu.VMEM((n_pad, d_pad), jnp.float32),    # running layer-sum
                pltpu.VMEM((t, d_pad), jnp.float32),        # per row-block accumulator
            ],
        ),
        compiler_params=pltpu.CompilerParams(
            # Layer-carried VMEM state forbids megacore sharding of the m axis here.
            dimension_semantics=("arbitrary", "arbitrary", "arbitrary"),
            vmem_limit_bytes=_vmem_limit_bytes(est),
        ),
    )
    return call(a_bf, x_pad)


# --------------------------------------------------------------------------- #
# Per-layer tiled fallback (graphs whose resident state does not fit VMEM)
# --------------------------------------------------------------------------- #
def _prop_kernel(a_ref, x_ref, accin_ref, xout_ref, accout_ref, acc_sc):
    """xout[m]    = sum_k A[m, k] @ X[k]     (bf16 in, f32 accumulate)
       accout[m]  = accin[m] + xout[m]       (running layer sum)"""
    k = pl.program_id(1)

    @pl.when(k == 0)
    def _():
        acc_sc[...] = jnp.zeros_like(acc_sc)

    acc_sc[...] += jnp.dot(a_ref[...], x_ref[...],
                           preferred_element_type=jnp.float32)

    @pl.when(k == pl.num_programs(1) - 1)
    def _():
        xout_ref[...] = acc_sc[...].astype(xout_ref.dtype)
        accout_ref[...] = accin_ref[...] + acc_sc[...]


def _make_prop_call(n_pad: int, d_pad: int, t: int):
    grid = (n_pad // t, n_pad // t)
    est = _layerwise_vmem_estimate(t, d_pad)
    return pl.pallas_call(
        _prop_kernel,
        out_shape=(
            jax.ShapeDtypeStruct((n_pad, d_pad), jnp.bfloat16),  # new X (bf16)
            jax.ShapeDtypeStruct((n_pad, d_pad), jnp.float32),   # new layer-sum
        ),
        grid_spec=pltpu.PrefetchScalarGridSpec(
            num_scalar_prefetch=0,
            grid=grid,
            in_specs=[
                pl.BlockSpec((t, t), lambda m, k: (m, k)),        # A tile (bf16)
                pl.BlockSpec((t, d_pad), lambda m, k: (k, 0)),    # X tile (bf16)
                pl.BlockSpec((t, d_pad), lambda m, k: (m, 0)),    # acc_in (f32)
            ],
            out_specs=[
                pl.BlockSpec((t, d_pad), lambda m, k: (m, 0)),    # X out (bf16)
                pl.BlockSpec((t, d_pad), lambda m, k: (m, 0)),    # acc out (f32)
            ],
            scratch_shapes=[pltpu.VMEM((t, d_pad), jnp.float32)],
        ),
        # acc_in (input 2) is updated in place into acc_out (output 1): no fresh
        # NxD f32 HBM buffer per layer. X must NOT be aliased with xout — later
        # row-blocks still read X as a k-block after xout[m] is written.
        input_output_aliases={2: 1},
        compiler_params=pltpu.CompilerParams(
            dimension_semantics=("parallel", "arbitrary"),
            vmem_limit_bytes=_vmem_limit_bytes(est),
        ),
    )


def _layerwise_forward(a_bf, x_pad, *, n_layers: int, t: int, n_pad: int, d_pad: int):
    prop = _make_prop_call(n_pad, d_pad, t)
    x_bf = x_pad.astype(jnp.bfloat16)
    acc = x_pad
    for _ in range(n_layers):
        # TODO(synk): a dedicated last-layer variant could drop the dead bf16 xout
        # write and fold the mean (the fused path above already does both).
        x_bf, acc = prop(a_bf, x_bf, acc)
    return acc * (1.0 / float(n_layers + 1))


# --------------------------------------------------------------------------- #
# Forward pass of GNN_Encoder_edge_index
# --------------------------------------------------------------------------- #
def gnn_encoder_edge_index(x, edge_index, *, n_layers: int, num_users: int,
                           num_items: int, tile: int = 2048, fuse_layers=None):
    """Returns (users, items) = split(mean_l A^l x, [num_users, num_items])."""
    num_nodes, feat = x.shape
    assert num_nodes == num_users + num_items

    if n_layers == 0:
        return x[:num_users], x[num_users:]

    # Lane-dense, tile-aligned padded shapes.
    t = min(_round_up(tile, 128), _round_up(num_nodes, 128))
    n_pad = _round_up(num_nodes, t)
    d_pad = _round_up(feat, 128)

    a_bf = build_normalized_adjacency(edge_index, num_nodes, n_pad)
    x_pad = (jnp.zeros((n_pad, d_pad), jnp.float32)
             .at[:num_nodes, :feat].set(x.astype(jnp.float32)))

    if fuse_layers is None:
        # Fuse all layers into one kernel when the resident X/acc state plus the
        # streamed tiles fit comfortably in VMEM on every generation (v7x: 64 MiB/TC).
        fuse_layers = _fused_vmem_estimate(n_pad, d_pad, t) < (40 << 20)

    if fuse_layers:
        light_pad = _fused_forward(a_bf, x_pad, n_layers=n_layers, t=t,
                                   n_pad=n_pad, d_pad=d_pad)
    else:
        light_pad = _layerwise_forward(a_bf, x_pad, n_layers=n_layers, t=t,
                                       n_pad=n_pad, d_pad=d_pad)

    light_out = light_pad[:num_nodes, :feat].astype(x.dtype)
    return light_out[:num_users], light_out[num_users:]


# --------------------------------------------------------------------------- #
# Pure-JAX references
# --------------------------------------------------------------------------- #
def _reference_f32(x, edge_index, *, n_layers, num_users, num_items):
    """Exact f32 forward of the PyTorch module."""
    num_nodes = x.shape[0]
    src, dst = edge_index[0], edge_index[1]
    deg = jnp.zeros((num_nodes,), jnp.float32).at[dst].add(1.0)
    dinv = jnp.where(deg > 0, jax.lax.rsqrt(jnp.maximum(deg, 1e-12)), 0.0)
    norm = dinv[dst] * dinv[src]
    a = jnp.zeros((num_nodes, num_nodes), jnp.float32).at[dst, src].add(norm)
    cur = x.astype(jnp.float32)
    acc = cur
    for _ in range(n_layers):
        cur = a @ cur
        acc = acc + cur
    out = (acc / float(n_layers + 1)).astype(x.dtype)
    return out[:num_users], out[num_users:]


def _reference_bf16(x, edge_index, *, n_layers, num_users, num_items):
    """Same quantization (bf16 A / bf16 X operands, f32 accumulate) as the kernels."""
    num_nodes, _ = x.shape
    a_bf = build_normalized_adjacency(edge_index, num_nodes, num_nodes)
    xb = x.astype(jnp.bfloat16)
    acc = x.astype(jnp.float32)
    for _ in range(n_layers):
        xf = jnp.dot(a_bf, xb, preferred_element_type=jnp.float32)
        acc = acc + xf
        xb = xf.astype(jnp.bfloat16)
    out = (acc / float(n_layers + 1)).astype(x.dtype)
    return out[:num_users], out[num_users:]


if __name__ == "__main__":
    key = jax.random.PRNGKey(0)

    # Small synthetic problem consistent with the module's forward.
    num_users, num_items = 12, 20
    num_nodes = num_users + num_items
    feat_dim = 48
    n_layers = 3

    k_x, k_e = jax.random.split(key, 2)
    # Node embeddings (data.x): deterministic init, no checkpoint load.
    x = jax.random.normal(k_x, (num_nodes, feat_dim), dtype=jnp.float32)

    # Unique bipartite user-item interactions, symmetrized (standard LightGCN
    # edge_index: both directions, no duplicate edges).
    num_interactions = 64
    pair_ids = jax.random.permutation(k_e, num_users * num_items)[:num_interactions]
    u = pair_ids // num_items
    i = pair_ids % num_items + num_users
    src = jnp.concatenate([u, i])
    dst = jnp.concatenate([i, u])
    edge_index = jnp.stack([src, dst], axis=0).astype(jnp.int32)  # (2, 2E)

    rb_u, rb_i = _reference_bf16(x, edge_index, n_layers=n_layers,
                                 num_users=num_users, num_items=num_items)
    rf_u, rf_i = _reference_f32(x, edge_index, n_layers=n_layers,
                                num_users=num_users, num_items=num_items)

    # Exercise both the fused-layer path and the tiled per-layer fallback.
    for fuse in (True, False):
        users, items = gnn_encoder_edge_index(
            x, edge_index, n_layers=n_layers, num_users=num_users,
            num_items=num_items, fuse_layers=fuse)
        users = jax.block_until_ready(users)
        items = jax.block_until_ready(items)

        assert users.shape == (num_users, feat_dim)
        assert items.shape == (num_items, feat_dim)

        # Same bf16-operand quantization as the kernels.
        assert jnp.allclose(users, rb_u, atol=1e-2, rtol=1e-2)
        assert jnp.allclose(items, rb_i, atol=1e-2, rtol=1e-2)
        # Exact f32 PyTorch semantics (tolerance loosened only for the deliberate
        # bf16 cast of the MXU operands).
        assert jnp.allclose(users, rf_u, atol=5e-2, rtol=5e-2)
        assert jnp.allclose(items, rf_i, atol=5e-2, rtol=5e-2)

    print("KERNEL_OK")
</pallas_src>

<mosaic_0001>
module attributes {stable_mosaic.version = 11 : i64} {
  func.func @kernel(%arg0: i32, %arg1: i32, %arg2: i32, %arg3: memref<128x128xbf16, #tpu.memory_space<vmem>>, %arg4: memref<128x128xf32, #tpu.memory_space<vmem>>, %arg5: memref<128x128xf32, #tpu.memory_space<vmem>>, %arg6: memref<128x128xbf16, #tpu.memory_space<vmem>>, %arg7: memref<128x128xbf16, #tpu.memory_space<vmem>>, %arg8: memref<128x128xf32, #tpu.memory_space<vmem>>, %arg9: memref<128x128xf32, #tpu.memory_space<vmem>>) attributes {dimension_semantics = [#tpu.dimension_semantics<arbitrary>, #tpu.dimension_semantics<arbitrary>, #tpu.dimension_semantics<arbitrary>], iteration_bounds = array<i64: 3, 1, 1>, scalar_prefetch = 0 : i64, scratch_operands = 4 : i64, tpu.core_type = #tpu.core_type<tc>, window_params = [{transform_indices = @transform_0, window_bounds = array<i64: 128, 128>}, {pipeline_mode = #tpu.pipeline_mode<synchronous>, transform_indices = @transform_1, window_bounds = array<i64: 128, 128>}, {transform_indices = @transform_2, window_bounds = array<i64: 128, 128>}]} {
    %c0_i32 = arith.constant 0 : i32
    %0 = arith.cmpi eq, %arg0, %c0_i32 : i32
    %c0_i32_0 = arith.constant 0 : i32
    %1 = arith.cmpi eq, %arg1, %c0_i32_0 : i32
    %2 = arith.andi %0, %1 : i1
    %c0_i32_1 = arith.constant 0 : i32
    %3 = arith.cmpi eq, %arg2, %c0_i32_1 : i32
    %4 = arith.andi %2, %3 : i1
    %5 = arith.extui %4 : i1 to i32
    %c0_i32_2 = arith.constant 0 : i32
    %6 = arith.cmpi ne, %5, %c0_i32_2 : i32
    scf.if %6 {
      %c0_19 = arith.constant 0 : index
      %c0_20 = arith.constant 0 : index
      %39 = vector.load %arg4[%c0_19, %c0_20] : memref<128x128xf32, #tpu.memory_space<vmem>>, vector<128x128xf32>
      %c0_21 = arith.constant 0 : index
      %c0_22 = arith.constant 0 : index
      %40 = vector.load %arg8[%c0_21, %c0_22] : memref<128x128xf32, #tpu.memory_space<vmem>>, vector<128x128xf32>
      tpu.vector_store %arg8[%c0_21, %c0_22], %39 {strides = array<i32>} : memref<128x128xf32, #tpu.memory_space<vmem>>, vector<128x128xf32>,
      %41 = arith.truncf %39 : vector<128x128xf32> to vector<128x128xbf16>
      %c0_23 = arith.constant 0 : index
      %c0_24 = arith.constant 0 : index
      %42 = vector.load %arg6[%c0_23, %c0_24] : memref<128x128xbf16, #tpu.memory_space<vmem>>, vector<128x128xbf16>
      tpu.vector_store %arg6[%c0_23, %c0_24], %41 {strides = array<i32>} : memref<128x128xbf16, #tpu.memory_space<vmem>>, vector<128x128xbf16>,
    } else {
    }
    %c0_i32_3 = arith.constant 0 : i32
    %7 = arith.cmpi eq, %arg2, %c0_i32_3 : i32
    %8 = arith.extui %7 : i1 to i32
    %c0_i32_4 = arith.constant 0 : i32
    %9 = arith.cmpi ne, %8, %c0_i32_4 : i32
    scf.if %9 {
      %cst_19 = arith.constant 0.000000e+00 : f32
      %39 = vector.broadcast %cst_19 : f32 to vector<128x128xf32>
      %c0_20 = arith.constant 0 : index
      %c0_21 = arith.constant 0 : index
      %40 = vector.load %arg9[%c0_20, %c0_21] : memref<128x128xf32, #tpu.memory_space<vmem>>, vector<128x128xf32>
      tpu.vector_store %arg9[%c0_20, %c0_21], %39 {strides = array<i32>} : memref<128x128xf32, #tpu.memory_space<vmem>>, vector<128x128xf32>,
    } else {
    }
    %c2_i32 = arith.constant 2 : i32
    %10 = arith.remsi %arg0, %c2_i32 : i32
    %c0_i32_5 = arith.constant 0 : i32
    %11 = arith.cmpi eq, %10, %c0_i32_5 : i32
    %true = arith.constant true
    %12 = arith.xori %11, %true : i1
    %c128_i32 = arith.constant 128 : i32
    %13 = arith.muli %arg2, %c128_i32 : i32
    %14 = tpu.assume_multiple %13, 128 : i32
    %15 = arith.index_cast %14 : i32 to index
    %c0 = arith.constant 0 : index
    %16 = vector.load %arg6[%15, %c0] : memref<128x128xbf16, #tpu.memory_space<vmem>>, vector<128x128xbf16>
    %17 = arith.index_cast %14 : i32 to index
    %c0_6 = arith.constant 0 : index
    %18 = vector.load %arg7[%17, %c0_6] : memref<128x128xbf16, #tpu.memory_space<vmem>>, vector<128x128xbf16>
    %19 = arith.select %11, %16, %18 : vector<128x128xbf16>
    %c0_7 = arith.constant 0 : index
    %c0_8 = arith.constant 0 : index
    %20 = vector.load %arg9[%c0_7, %c0_8] : memref<128x128xf32, #tpu.memory_space<vmem>>, vector<128x128xf32>
    %c0_9 = arith.constant 0 : index
    %c0_10 = arith.constant 0 : index
    %21 = vector.load %arg3[%c0_9, %c0_10] : memref<128x128xbf16, #tpu.memory_space<vmem>>, vector<128x128xbf16>
    %cst = arith.constant dense<0.000000e+00> : vector<128x128xf32>
    %22 = tpu.matmul %21, %19, %cst {dimension_numbers = #tpu.dot_dimension_numbers<[1], [0], [0], [1], [0, 0, 1, 1], [], []>} : vector<128x128xbf16>, vector<128x128xbf16>, vector<128x128xf32> -> vector<128x128xf32>
    %23 = arith.addf %20, %22 : vector<128x128xf32>
    %c0_11 = arith.constant 0 : index
    %c0_12 = arith.constant 0 : index
    %24 = vector.load %arg9[%c0_11, %c0_12] : memref<128x128xf32, #tpu.memory_space<vmem>>, vector<128x128xf32>
    tpu.vector_store %arg9[%c0_11, %c0_12], %23 {strides = array<i32>} : memref<128x128xf32, #tpu.memory_space<vmem>>, vector<128x128xf32>,
    %c0_i32_13 = arith.constant 0 : i32
    %25 = arith.cmpi eq, %arg2, %c0_i32_13 : i32
    %c2_i32_14 = arith.constant 2 : i32
    %26 = arith.cmpi ne, %arg0, %c2_i32_14 : i32
    %c128_i32_15 = arith.constant 128 : i32
    %27 = arith.muli %arg1, %c128_i32_15 : i32
    %28 = tpu.assume_multiple %27, 128 : i32
    %29 = arith.andi %25, %11 : i1
    %30 = arith.andi %29, %26 : i1
    %31 = arith.extui %30 : i1 to i32
    %c0_i32_16 = arith.constant 0 : i32
    %32 = arith.cmpi ne, %31, %c0_i32_16 : i32
    scf.if %32 {
      %c0_19 = arith.constant 0 : index
      %c0_20 = arith.constant 0 : index
      %39 = vector.load %arg9[%c0_19, %c0_20] : memref<128x128xf32, #tpu.memory_space<vmem>>, vector<128x128xf32>
      %40 = arith.truncf %39 : vector<128x128xf32> to vector<128x128xbf16>
      %41 = arith.index_cast %28 : i32 to index
      %c0_21 = arith.constant 0 : index
      %42 = vector.load %arg7[%41, %c0_21] : memref<128x128xbf16, #tpu.memory_space<vmem>>, vector<128x128xbf16>
      tpu.vector_store %arg7[%41, %c0_21], %40 {strides = array<i32>} : memref<128x128xbf16, #tpu.memory_space<vmem>>, vector<128x128xbf16>,
    } else {
    }
    %33 = arith.andi %25, %12 : i1
    %34 = arith.andi %33, %26 : i1
    %35 = arith.extui %34 : i1 to i32
    %c0_i32_17 = arith.constant 0 : i32
    %36 = arith.cmpi ne, %35, %c0_i32_17 : i32
    scf.if %36 {
      %c0_19 = arith.constant 0 : index
      %c0_20 = arith.constant 0 : index
      %39 = vector.load %arg9[%c0_19, %c0_20] : memref<128x128xf32, #tpu.memory_space<vmem>>, vector<128x128xf32>
      %40 = arith.truncf %39 : vector<128x128xf32> to vector<128x128xbf16>
      %41 = arith.index_cast %28 : i32 to index
      %c0_21 = arith.constant 0 : index
      %42 = vector.load %arg6[%41, %c0_21] : memref<128x128xbf16, #tpu.memory_space<vmem>>, vector<128x128xbf16>
      tpu.vector_store %arg6[%41, %c0_21], %40 {strides = array<i32>} : memref<128x128xbf16, #tpu.memory_space<vmem>>, vector<128x128xbf16>,
    } else {
    }
    %37 = arith.extui %25 : i1 to i32
    %c0_i32_18 = arith.constant 0 : i32
    %38 = arith.cmpi ne, %37, %c0_i32_18 : i32
    scf.if %38 {
      %39 = arith.index_cast %28 : i32 to index
      %c0_19 = arith.constant 0 : index
      %40 = vector.load %arg8[%39, %c0_19] : memref<128x128xf32, #tpu.memory_space<vmem>>, vector<128x128xf32>
      %c0_20 = arith.constant 0 : index
      %c0_21 = arith.constant 0 : index
      %41 = vector.load %arg9[%c0_20, %c0_21] : memref<128x128xf32, #tpu.memory_space<vmem>>, vector<128x128xf32>
      %42 = arith.addf %40, %41 : vector<128x128xf32>
      %43 = arith.index_cast %28 : i32 to index
      %c0_22 = arith.constant 0 : index
      %44 = vector.load %arg8[%43, %c0_22] : memref<128x128xf32, #tpu.memory_space<vmem>>, vector<128x128xf32>
      tpu.vector_store %arg8[%43, %c0_22], %42 {strides = array<i32>} : memref<128x128xf32, #tpu.memory_space<vmem>>, vector<128x128xf32>,
      %cst_23 = arith.constant 2.500000e-01 : f32
      %45 = vector.broadcast %cst_23 : f32 to vector<128x128xf32>
      %46 = arith.mulf %42, %45 : vector<128x128xf32>
      %c0_24 = arith.constant 0 : index
      %c0_25 = arith.constant 0 : index
      %47 = vector.load %arg5[%c0_24, %c0_25] : memref<128x128xf32, #tpu.memory_space<vmem>>, vector<128x128xf32>
      tpu.vector_store %arg5[%c0_24, %c0_25], %46 {strides = array<i32>} : memref<128x128xf32, #tpu.memory_space<vmem>>, vector<128x128xf32>,
    } else {
    }
    return
  }
  func.func @transform_0(%arg0: i32, %arg1: i32, %arg2: i32) -> (i32, i32) {
    %c0_i32 = arith.constant 0 : i32
    return %arg1, %arg2 : i32, i32
  }
  func.func @transform_1(%arg0: i32, %arg1: i32, %arg2: i32) -> (i32, i32) {
    %c0_i32 = arith.constant 0 : i32
    %c0_i32_0 = arith.constant 0 : i32
    %c0_i32_1 = arith.constant 0 : i32
    return %c0_i32, %c0_i32_0 : i32, i32
  }
  func.func @transform_2(%arg0: i32, %arg1: i32, %arg2: i32) -> (i32, i32) {
    %c0_i32 = arith.constant 0 : i32
    %c0_i32_0 = arith.constant 0 : i32
    return %arg1, %c0_i32 : i32, i32
  }
}

</mosaic_0001>

<llo_original>
// kernel: tpu_custom_call.1
$region0: #{tpu_custom_call.1}
  #allocation0 [shape = 'u32[]', space=smem, size = 0x4, offset = 0x4, fixed_abs, tag = 'smem constant byte address 0x4 - core index']
  #allocation1 [shape = 'u32[144,128]{1,0:T(1,128)}', space=vmem, size = 0x12000, scoped, tag = 'internal scratch']
  #allocation2 [shape = 'bf16[128,128]{1,0:T(16,128)(2,1)}', space=vmem, size = 0x8000, scoped, tag = 'scratch operand']
  #allocation3 [shape = 'bf16[128,128]{1,0:T(16,128)(2,1)}', space=vmem, size = 0x8000, scoped, tag = 'scratch operand']
  #allocation4 [shape = 'f32[128,128]{1,0:T(8,128)}', space=vmem, size = 0x10000, scoped, tag = 'scratch operand']
  #allocation5 [shape = 'f32[128,128]{1,0:T(8,128)}', space=vmem, size = 0x10000, scoped, tag = 'scratch operand']
  %s0 = inlined_call_operand.hbm [shape: bf16[128,128], index: 0, kind: input, shape index: {}]
  %s1 = inlined_call_operand.hbm [shape: f32[128,128], index: 1, kind: input, shape index: {}]
  %s2 = inlined_call_operand.hbm [shape: f32[128,128], index: 2, kind: output, shape index: {}]
  %s3 = sld [smem:[#allocation0]]
  $region69: #{tpu_custom_call.1} parent=0
    _
  %s5 = ssub.s32 1, %s3
  %s6 = scalar_select 0, %s5, %s3
  $region1: #{tpu_custom_call.1} parent=0
    #allocation6 [shape = 'u8[32768]{0}', space=vmem, size = 0x8000, scoped, tag = 'input window, operand 0, single buffered']
    #allocation7 [shape = 's32[2]{0}', space=sflag, size = 0x8, scoped, tag = 'scoped memory for tpu_custom_call.1']
    #allocation8 [shape = 's32[2]{0}', space=sflag, size = 0x8, scoped, tag = 'scoped memory for tpu_custom_call.1']
    #allocation9 [shape = 'u8[65536]{0}', space=vmem, size = 0x10000, scoped, tag = 'input window, operand 1, single buffered']
    #allocation10 [shape = 's32[1]{0}', space=sflag, size = 0x4, scoped, tag = 'scoped memory for tpu_custom_call.1']
    #allocation11 [shape = 'u8[65536]{0}', space=vmem, size = 0x10000, scoped, tag = 'output window, operand 0, single buffered']
    %7 = vsyncpa [#allocation7], 0
    %8 = vsyncpa [#allocation10], 0
    %9 = vsyncpa [#allocation8], 0
    loop: start=0, step=1, limit=5
    $region2: #{tpu_custom_call.1} parent=1 // loop_pre_header
      _
    $region3: #{tpu_custom_call.1} parent=1 // loop_header
      %s11 = sphi 0, %s15
      %p12 = scmp.ge.s32.totalorder %s11, 5
      %s18 = sphi 0, %s37
      %s19 = sphi 0, %s33
      %s20 = sphi 0, %s29
      %s21 = sphi 0, %s18
      %s22 = sphi 0, %s19
      %s23 = sphi 0, %s20
      %s24 = sphi 0, %s21
      %s25 = sphi 0, %s22
      %s26 = sphi 0, %s23
      %s42 = sphi 0, %s44
      %s45 = sphi 0, %s42
      %s46 = sphi 0, %s45
      %s62 = sphi 0, %s46
      %s66 = sphi 0, %s66
      %s68 = sphi 0, %s66
      %s69 = sphi 0, %s68
      %s83 = sphi 0, %s69
      %s89 = sphi 0, %s91
      %s92 = sphi 0, %s89
      %s93 = sphi 0, %s92
      %s109 = sphi 0, %s93
    $region4: #{tpu_custom_call.1} parent=1 // loop_header_branch
      %14 = sbr.rel (%p12) target = $region8
    $region5: #{tpu_custom_call.1} parent=1 // loop_body
      %s16 = ssub.s32 %s11, 1
      %s17 = ssub.s32 %s11, 2
      %s27 = sadd.s32 1, %s20
      %p28 = scmp.ge.s32.totalorder %s27, 1
      %s29 = scalar_select %p28, 0, %s27
      %s30 = sadd.s32 1, %s19
      %s31 = scalar_select %p28, %s30, %s19
      %p32 = scmp.ge.s32.totalorder %s31, 1
      %s33 = scalar_select %p32, 0, %s31
      %s34 = sadd.s32 1, %s18
      %s35 = scalar_select %p32, %s34, %s18
      %p36 = scmp.ge.s32.totalorder %s35, 3
      %s37 = scalar_select %p36, 0, %s35
      %s38 = ssub.s32 %s19, %s33
      %s39 = ssub.s32 %s20, %s29
      %s40 = sor.u32 %s38, %s39
      %p41 = scmp.eq.s32.totalorder %s40, 0
      %s43 = sadd.s32 %s42, 1
      %s44 = scalar_select %p41, %s42, %s43
      %p47 = pneg %p41
      %p48 = scmp.eq.s32.totalorder %s11, 2
      %p49 = por %p47, %p48
      %p50 = scmp.ne.s32.totalorder %s42, %s45
      %p51 = scmp.eq.s32.totalorder %s11, 0
      %p52 = por %p50, %p51
      %p53 = scmp.ne.s32.totalorder %s42, %s45
      %p54 = scmp.eq.s32.totalorder %s16, 2
      %p55 = por %p53, %p54
      %p56 = scmp.ne.s32.totalorder %s45, %s46
      %p57 = scmp.eq.s32.totalorder %s16, 0
      %p58 = por %p56, %p57
      %p59 = scmp.ne.s32.totalorder %s45, %s46
      %p60 = scmp.eq.s32.totalorder %s17, 2
      %p61 = por %p59, %p60
      %p63 = scmp.ne.s32.totalorder %s46, %s62
      %p64 = scmp.eq.s32.totalorder %s17, 0
      %p65 = por %p63, %p64
      %s67 = sadd.s32 %s66, 1
      %p70 = scmp.eq.s32.totalorder %s11, 2
      %p71 = scmp.ne.s32.totalorder %s66, %s68
      %p72 = scmp.eq.s32.totalorder %s11, 0
      %p73 = por %p71, %p72
      %p74 = scmp.ne.s32.totalorder %s66, %s68
      %p75 = scmp.eq.s32.totalorder %s16, 2
      %p76 = por %p74, %p75
      %p77 = scmp.ne.s32.totalorder %s68, %s69
      %p78 = scmp.eq.s32.totalorder %s16, 0
      %p79 = por %p77, %p78
      %p80 = scmp.ne.s32.totalorder %s68, %s69
      %p81 = scmp.eq.s32.totalorder %s17, 2
      %p82 = por %p80, %p81
      %p84 = scmp.ne.s32.totalorder %s69, %s83
      %p85 = scmp.eq.s32.totalorder %s17, 0
      %p86 = por %p84, %p85
      %s87 = ssub.s32 %s19, %s33
      %p88 = scmp.eq.s32.totalorder %s87, 0
      %s90 = sadd.s32 %s89, 1
      %s91 = scalar_select %p88, %s89, %s90
      %p94 = pneg %p88
      %p95 = scmp.eq.s32.totalorder %s11, 2
      %p96 = por %p94, %p95
      %p97 = scmp.ne.s32.totalorder %s89, %s92
      %p98 = scmp.eq.s32.totalorder %s11, 0
      %p99 = por %p97, %p98
      %p100 = scmp.ne.s32.totalorder %s89, %s92
      %p101 = scmp.eq.s32.totalorder %s16, 2
      %p102 = por %p100, %p101
      %p103 = scmp.ne.s32.totalorder %s92, %s93
      %p104 = scmp.eq.s32.totalorder %s16, 0
      %p105 = por %p103, %p104
      %p106 = scmp.ne.s32.totalorder %s92, %s93
      %p107 = scmp.eq.s32.totalorder %s17, 2
      %p108 = por %p106, %p107
      %p110 = scmp.ne.s32.totalorder %s93, %s109
      %p111 = scmp.eq.s32.totalorder %s17, 0
      %p112 = por %p110, %p111
      %p113 = scmp.le.s32.totalorder 1, %s11
      %p114 = scmp.lt.s32.totalorder %s11, 4
      %p115 = pnand %p113, %p114
      %p116 = pneg %p115
      // Predicated region
      $region9: #{tpu_custom_call.1} parent=5 // pred_check
        _
      $region10: #{tpu_custom_call.1} parent=5 // pred_check_branch
        %118 = sbr.rel (%p115) target = $region12
      $region11: #{tpu_custom_call.1} parent=5 // pred_region
        %s119 = ssub.s32 %s11, 1
        // Predicated region
        $region13: #{tpu_custom_call.1} parent=11 // pred_check
          %p120 = pneg %p58
        $region14: #{tpu_custom_call.1} parent=11 // pred_check_branch
          %122 = sbr.rel (%p120) target = $region16
        $region15: #{tpu_custom_call.1} parent=11 // pred_region
          %s123 = smul.u32 16, %s22
          %s125 = ssub.s32 1024, 1024
          %126 = vsyncadd [#allocation7], %s125
          %s127 = sadd.s32 %s23, %s123
          %s128 = smul.addr %s127, 64
          %s129 = scalar_lea.hbm %s0, %s128
          %s130 = sshll.u32 [#allocation6], 4
          %s131 = int_to_ptr.vmem [resolvable:$true] %s130
          %136 = dma.hbm_to_vmem [thread:$0]  %s129, 1024, %s131, [#allocation7], 64, 64, 4
        $region16: #{tpu_custom_call.1} parent=11 // pred_fallthru
          _
        // Predicated region
        $region17: #{tpu_custom_call.1} parent=11 // pred_check
          %p137 = pneg %p79
        $region18: #{tpu_custom_call.1} parent=11 // pred_check_branch
          %139 = sbr.rel (%p137) target = $region20
        $region19: #{tpu_custom_call.1} parent=11 // pred_region
          %s141 = ssub.s32 2048, 2048
          %142 = vsyncadd [#allocation10], %s141
          %s143 = sshll.u32 [#allocation9], 4
          %s144 = int_to_ptr.vmem [resolvable:$true] %s143
          %149 = dma.hbm_to_vmem [thread:$0]  %s1, 2048, %s144, [#allocation10], 128, 128, 8
        $region20: #{tpu_custom_call.1} parent=11 // pred_fallthru
          _
      $region12: #{tpu_custom_call.1} parent=5 // pred_fallthru
        _
      %p150 = scmp.lt.s32.totalorder %s11, 3
      // Predicated region
      $region21: #{tpu_custom_call.1} parent=5 // pred_check
        %p151 = pneg %p150
      $region22: #{tpu_custom_call.1} parent=5 // pred_check_branch
        %153 = sbr.rel (%p151) target = $region24
      $region23: #{tpu_custom_call.1} parent=5 // pred_region
        _
      $region24: #{tpu_custom_call.1} parent=5 // pred_fallthru
        _
      %p154 = scmp.le.s32.totalorder 1, %s11
      %p155 = scmp.lt.s32.totalorder %s11, 4
      %p156 = pnand %p154, %p155
      %p157 = pneg %p156
      // Predicated region
      $region25: #{tpu_custom_call.1} parent=5 // pred_check
        _
      $region26: #{tpu_custom_call.1} parent=5 // pred_check_branch
        %159 = sbr.rel (%p156) target = $region28
      $region27: #{tpu_custom_call.1} parent=5 // pred_region
        %s160 = ssub.s32 %s11, 1
        // Predicated region
        $region29: #{tpu_custom_call.1} parent=27 // pred_check
          %p161 = pneg %p58
        $region30: #{tpu_custom_call.1} parent=27 // pred_check_branch
          %163 = sbr.rel (%p161) target = $region32
        $region31: #{tpu_custom_call.1} parent=27 // pred_region
          %164 = dma.done [#allocation7], 1024
        $region32: #{tpu_custom_call.1} parent=27 // pred_fallthru
          _
        // Predicated region
        $region33: #{tpu_custom_call.1} parent=27 // pred_check
          %p165 = pneg %p79
        $region34: #{tpu_custom_call.1} parent=27 // pred_check_branch
          %167 = sbr.rel (%p165) target = $region36
        $region35: #{tpu_custom_call.1} parent=27 // pred_region
          %168 = dma.done [#allocation10], 2048
        $region36: #{tpu_custom_call.1} parent=27 // pred_fallthru
          _
        %p169 = pneg %p58
        %p170 = pneg %p55
        %p171 = pneg %p79
        %p172 = pneg %p76
        %p173 = pneg %p105
        %p174 = pneg %p102
        %s175 = smul.u32 16, %s22
        %s176 = smul.u32 16, %s22
        %p178 = scmp.eq.s32.totalorder %s21, 0
        %p179 = scmp.eq.s32.totalorder %s22, 0
        %p180 = pnand %p178, %p179
        %p181 = pneg %p180
        %p182 = scmp.eq.s32.totalorder %s23, 0
        %p183 = pnand %p181, %p182
        %p184 = pneg %p183
        // Predicated region
        $region37: #{tpu_custom_call.1} parent=27 // pred_check
          _
        $region38: #{tpu_custom_call.1} parent=27 // pred_check_branch
          %186 = sbr.rel (%p183) target = $region40
        $region39: #{tpu_custom_call.1} parent=27 // pred_region
          %v187 = vld [vmem:[#allocation9] sm:$0xff]
          %v188 = vld [vmem:[#allocation9 + $0x8] sm:$0xff]
          %v189 = vld [vmem:[#allocation9 + $0x10] sm:$0xff]
          %v190 = vld [vmem:[#allocation9 + $0x18] sm:$0xff]
          %v191 = vld [vmem:[#allocation9 + $0x20] sm:$0xff]
          %v192 = vld [vmem:[#allocation9 + $0x28] sm:$0xff]
          %v193 = vld [vmem:[#allocation9 + $0x30] sm:$0xff]
          %v194 = vld [vmem:[#allocation9 + $0x38] sm:$0xff]
          %v195 = vld [vmem:[#allocation9 + $0x40] sm:$0xff]
          %v196 = vld [vmem:[#allocation9 + $0x48] sm:$0xff]
          %v197 = vld [vmem:[#allocation9 + $0x50] sm:$0xff]
          %v198 = vld [vmem:[#allocation9 + $0x58] sm:$0xff]
          %v199 = vld [vmem:[#allocation9 + $0x60] sm:$0xff]
          %v200 = vld [vmem:[#allocation9 + $0x68] sm:$0xff]
          %v201 = vld [vmem:[#allocation9 + $0x70] sm:$0xff]
          %v202 = vld [vmem:[#allocation9 + $0x78] sm:$0xff]
          %203 = vst [vmem:[#allocation4] sm:$0xff] %v187
          %204 = vst [vmem:[#allocation4 + $0x8] sm:$0xff] %v188
          %205 = vst [vmem:[#allocation4 + $0x10] sm:$0xff] %v189
          %206 = vst [vmem:[#allocation4 + $0x18] sm:$0xff] %v190
          %207 = vst [vmem:[#allocation4 + $0x20] sm:$0xff] %v191
          %208 = vst [vmem:[#allocation4 + $0x28] sm:$0xff] %v192
          %209 = vst [vmem:[#allocation4 + $0x30] sm:$0xff] %v193
          %210 = vst [vmem:[#allocation4 + $0x38] sm:$0xff] %v194
          %211 = vst [vmem:[#allocation4 + $0x40] sm:$0xff] %v195
          %212 = vst [vmem:[#allocation4 + $0x48] sm:$0xff] %v196
          %213 = vst [vmem:[#allocation4 + $0x50] sm:$0xff] %v197
          %214 = vst [vmem:[#allocation4 + $0x58] sm:$0xff] %v198
          %215 = vst [vmem:[#allocation4 + $0x60] sm:$0xff] %v199
          %216 = vst [vmem:[#allocation4 + $0x68] sm:$0xff] %v200
          %217 = vst [vmem:[#allocation4 + $0x70] sm:$0xff] %v201
          %218 = vst [vmem:[#allocation4 + $0x78] sm:$0xff] %v202
          %v219 = vpack.c.bf16 %v188, %v187
          %v220 = vpack.c.bf16 %v190, %v189
          %v221 = vpack.c.bf16 %v192, %v191
          %v222 = vpack.c.bf16 %v194, %v193
          %v223 = vpack.c.bf16 %v196, %v195
          %v224 = vpack.c.bf16 %v198, %v197
          %v225 = vpack.c.bf16 %v200, %v199
          %v226 = vpack.c.bf16 %v202, %v201
          %227 = vst [vmem:[#allocation2] sm:$0xff] %v219
          %228 = vst [vmem:[#allocation2 + $0x8] sm:$0xff] %v220
          %229 = vst [vmem:[#allocation2 + $0x10] sm:$0xff] %v221
          %230 = vst [vmem:[#allocation2 + $0x18] sm:$0xff] %v222
          %231 = vst [vmem:[#allocation2 + $0x20] sm:$0xff] %v223
          %232 = vst [vmem:[#allocation2 + $0x28] sm:$0xff] %v224
          %233 = vst [vmem:[#allocation2 + $0x30] sm:$0xff] %v225
          %234 = vst [vmem:[#allocation2 + $0x38] sm:$0xff] %v226
        $region40: #{tpu_custom_call.1} parent=27 // pred_fallthru
          _
        // Predicated region
        $region41: #{tpu_custom_call.1} parent=27 // pred_check
          %p235 = pneg %p182
        $region42: #{tpu_custom_call.1} parent=27 // pred_check_branch
          %237 = sbr.rel (%p235) target = $region44
        $region43: #{tpu_custom_call.1} parent=27 // pred_region
          %238 = vst [vmem:[#allocation5] sm:$0xff] 0.0
          %239 = vst [vmem:[#allocation5 + $0x8] sm:$0xff] 0.0
          %240 = vst [vmem:[#allocation5 + $0x10] sm:$0xff] 0.0
          %241 = vst [vmem:[#allocation5 + $0x18] sm:$0xff] 0.0
          %242 = vst [vmem:[#allocation5 + $0x20] sm:$0xff] 0.0
          %243 = vst [vmem:[#allocation5 + $0x28] sm:$0xff] 0.0
          %244 = vst [vmem:[#allocation5 + $0x30] sm:$0xff] 0.0
          %245 = vst [vmem:[#allocation5 + $0x38] sm:$0xff] 0.0
          %246 = vst [vmem:[#allocation5 + $0x40] sm:$0xff] 0.0
          %247 = vst [vmem:[#allocation5 + $0x48] sm:$0xff] 0.0
          %248 = vst [vmem:[#allocation5 + $0x50] sm:$0xff] 0.0
          %249 = vst [vmem:[#allocation5 + $0x58] sm:$0xff] 0.0
          %250 = vst [vmem:[#allocation5 + $0x60] sm:$0xff] 0.0
          %251 = vst [vmem:[#allocation5 + $0x68] sm:$0xff] 0.0
          %252 = vst [vmem:[#allocation5 + $0x70] sm:$0xff] 0.0
          %253 = vst [vmem:[#allocation5 + $0x78] sm:$0xff] 0.0
        $region44: #{tpu_custom_call.1} parent=27 // pred_fallthru
          _
        %p254 = scmp.lt.s32.totalorder %s21, 0
        %s255 = ssub.s32 0, %s21
        %s256 = scalar_select %p254, %s255, %s21
        %s257 = sand.u32 %s256, 1
        %s258 = ssub.s32 0, %s257
        %s259 = scalar_select %p254, %s258, %s257
        %p260 = scmp.eq.s32.totalorder %s259, 0
        %p261 = scmp.ne.s32.totalorder %s259, 0
        %s262 = smul.u32 %s23, 128
        %s263 = sshra.s32 %s262, 4
        %s264 = sand.u32 %s262, 15
        %s265 = smul.addr %s263, 8
        %s266 = scalar_lea.vmem [#allocation2], %s265
        %v267 = vld [vmem:[%s266] sm:$0xff]
        %v268 = vld [vmem:[%s266 + $0x8] sm:$0xff]
        %v269 = vld [vmem:[%s266 + $0x10] sm:$0xff]
        %v270 = vld [vmem:[%s266 + $0x18] sm:$0xff]
        %v271 = vld [vmem:[%s266 + $0x20] sm:$0xff]
        %v272 = vld [vmem:[%s266 + $0x28] sm:$0xff]
        %v273 = vld [vmem:[%s266 + $0x30] sm:$0xff]
        %v274 = vld [vmem:[%s266 + $0x38] sm:$0xff]
        %s275 = smul.addr %s263, 8
        %s276 = scalar_lea.vmem [#allocation3], %s275
        %v277 = vld [vmem:[%s276] sm:$0xff]
        %v278 = vld [vmem:[%s276 + $0x8] sm:$0xff]
        %v279 = vld [vmem:[%s276 + $0x10] sm:$0xff]
        %v280 = vld [vmem:[%s276 + $0x18] sm:$0xff]
        %v281 = vld [vmem:[%s276 + $0x20] sm:$0xff]
        %v282 = vld [vmem:[%s276 + $0x28] sm:$0xff]
        %v283 = vld [vmem:[%s276 + $0x30] sm:$0xff]
        %v284 = vld [vmem:[%s276 + $0x38] sm:$0xff]
        %s285 = scalar_select %p260, 1, 0
        %v286 = vstv %s285
        %vm287 = vcmp.eq.s32.totalorder %v286, 1
        %v288 = vsel %vm287, %v267, %v277
        %v289 = vsel %vm287, %v268, %v278
        %v290 = vsel %vm287, %v269, %v279
        %v291 = vsel %vm287, %v270, %v280
        %v292 = vsel %vm287, %v271, %v281
        %v293 = vsel %vm287, %v272, %v282
        %v294 = vsel %vm287, %v273, %v283
        %v295 = vsel %vm287, %v274, %v284
        %v296 = vld [vmem:[#allocation5] sm:$0xff]
        %v297 = vld [vmem:[#allocation5 + $0x8] sm:$0xff]
        %v298 = vld [vmem:[#allocation5 + $0x10] sm:$0xff]
        %v299 = vld [vmem:[#allocation5 + $0x18] sm:$0xff]
        %v300 = vld [vmem:[#allocation5 + $0x20] sm:$0xff]
        %v301 = vld [vmem:[#allocation5 + $0x28] sm:$0xff]
        %v302 = vld [vmem:[#allocation5 + $0x30] sm:$0xff]
        %v303 = vld [vmem:[#allocation5 + $0x38] sm:$0xff]
        %v304 = vld [vmem:[#allocation5 + $0x40] sm:$0xff]
        %v305 = vld [vmem:[#allocation5 + $0x48] sm:$0xff]
        %v306 = vld [vmem:[#allocation5 + $0x50] sm:$0xff]
        %v307 = vld [vmem:[#allocation5 + $0x58] sm:$0xff]
        %v308 = vld [vmem:[#allocation5 + $0x60] sm:$0xff]
        %v309 = vld [vmem:[#allocation5 + $0x68] sm:$0xff]
        %v310 = vld [vmem:[#allocation5 + $0x70] sm:$0xff]
        %v311 = vld [vmem:[#allocation5 + $0x78] sm:$0xff]
        %v312 = vld [vmem:[#allocation6] sm:$0xf]
        %v313 = vld [vmem:[#allocation6 + $0x4] sm:$0xf]
        %v314 = vld [vmem:[#allocation6 + $0x8] sm:$0xf]
        %v315 = vld [vmem:[#allocation6 + $0xc] sm:$0xf]
        %v316 = vld [vmem:[#allocation6 + $0x10] sm:$0xf]
        %v317 = vld [vmem:[#allocation6 + $0x14] sm:$0xf]
        %v318 = vld [vmem:[#allocation6 + $0x18] sm:$0xf]
        %v319 = vld [vmem:[#allocation6 + $0x1c] sm:$0xf]
        %v320 = vld [vmem:[#allocation6 + $0x20] sm:$0xf]
        %v321 = vld [vmem:[#allocation6 + $0x24] sm:$0xf]
        %v322 = vld [vmem:[#allocation6 + $0x28] sm:$0xf]
        %v323 = vld [vmem:[#allocation6 + $0x2c] sm:$0xf]
        %v324 = vld [vmem:[#allocation6 + $0x30] sm:$0xf]
        %v325 = vld [vmem:[#allocation6 + $0x34] sm:$0xf]
        %v326 = vld [vmem:[#allocation6 + $0x38] sm:$0xf]
        %v327 = vld [vmem:[#allocation6 + $0x3c] sm:$0xf]
        %v344 = vunpack.c.l.b16 %v312
        %v345 = vunpack.c.l.b16 %v313
        %v346 = vunpack.c.l.b16 %v314
        %v347 = vunpack.c.l.b16 %v315
        %v348 = vunpack.c.l.b16 %v316
        %v349 = vunpack.c.l.b16 %v317
        %v350 = vunpack.c.l.b16 %v318
        %v351 = vunpack.c.l.b16 %v319
        %v352 = vunpack.c.l.b16 %v320
        %v353 = vunpack.c.l.b16 %v321
        %v354 = vunpack.c.l.b16 %v322
        %v355 = vunpack.c.l.b16 %v323
        %v356 = vunpack.c.l.b16 %v324
        %v357 = vunpack.c.l.b16 %v325
        %v358 = vunpack.c.l.b16 %v326
        %v359 = vunpack.c.l.b16 %v327
        %v360 = vpack.c.b16 %v345, %v344
        %v361 = vpack.c.b16 %v347, %v346
        %v362 = vpack.c.b16 %v349, %v348
        %v363 = vpack.c.b16 %v351, %v350
        %v364 = vpack.c.b16 %v353, %v352
        %v365 = vpack.c.b16 %v355, %v354
        %v366 = vpack.c.b16 %v357, %v356
        %v367 = vpack.c.b16 %v359, %v358
        %376 = vmatprep.subr.bf16.mxu0 0
        %377 = vmatpush1.bf16.msra.mxu0 %v288
        %378 = vmatprep.subr.bf16.mxu0 0
        %379 = vmatpush1.bf16.msra.mxu0 %v289
        %380 = vmatprep.subr.bf16.mxu0 0
        %381 = vmatpush1.bf16.msra.mxu0 %v290
        %382 = vmatprep.subr.bf16.mxu0 0
        %383 = vmatpush1.bf16.msra.mxu0 %v291
        %384 = vmatprep.subr.bf16.mxu0 0
        %385 = vmatpush1.bf16.msra.mxu0 %v292
        %386 = vmatprep.subr.bf16.mxu0 0
        %387 = vmatpush1.bf16.msra.mxu0 %v293
        %388 = vmatprep.subr.bf16.mxu0 0
        %389 = vmatpush1.bf16.msra.mxu0 %v294
        %390 = vmatprep.subr.bf16.mxu0 0
        %391 = vmatpush1.bf16.msra.mxu0 %v295
        %392 = vmatprep.subr.bf16.mxu0 0
        %393 = vmatpush1.bf16.msra.mxu0 0
        %394 = vmatprep.subr.bf16.mxu0 0
        %395 = vmatpush1.bf16.msra.mxu0 0
        %396 = vmatprep.subr.bf16.mxu0 0
        %397 = vmatpush1.bf16.msra.mxu0 0
        %398 = vmatprep.subr.bf16.mxu0 0
        %399 = vmatpush1.bf16.msra.mxu0 0
        %400 = vmatprep.subr.bf16.mxu0 0
        %401 = vmatpush1.bf16.msra.mxu0 0
        %402 = vmatprep.subr.bf16.mxu0 0
        %403 = vmatpush1.bf16.msra.mxu0 0
        %404 = vmatprep.subr.bf16.mxu0 0
        %405 = vmatpush1.bf16.msra.mxu0 0
        %406 = vmatprep.subr.bf16.mxu0 0
        %407 = vmatpush1.bf16.msra.mxu0 0
        %408 = vmatprep.mubr.bf16.mxu0 0
        %409 = vmatmul.mubr.bf16.gmra.mrb[0].mxu0 %v360
        %v410 = vpop.f32.mrb[0].mxu0
        %v411 = vadd.f32 0.0, %v410
        %v412 = vpop.f32.mrb[0].mxu0
        %v413 = vpop.f32.mrb[0].mxu0
        %v414 = vadd.f32 0.0, %v413
        %v415 = vpop.f32.mrb[0].mxu0
        %416 = vmatprep.mubr.bf16.mxu0 0
        %417 = vmatmul.mubr.bf16.gmra.mrb[0].mxu0 %v361
        %v418 = vpop.f32.mrb[0].mxu0
        %v419 = vadd.f32 0.0, %v418
        %v420 = vpop.f32.mrb[0].mxu0
        %v421 = vpop.f32.mrb[0].mxu0
        %v422 = vadd.f32 0.0, %v421
        %v423 = vpop.f32.mrb[0].mxu0
        %424 = vmatprep.mubr.bf16.mxu0 0
        %425 = vmatmul.mubr.bf16.gmra.mrb[0].mxu0 %v362
        %v426 = vpop.f32.mrb[0].mxu0
        %v427 = vadd.f32 0.0, %v426
        %v428 = vpop.f32.mrb[0].mxu0
        %v429 = vpop.f32.mrb[0].mxu0
        %v430 = vadd.f32 0.0, %v429
        %v431 = vpop.f32.mrb[0].mxu0
        %432 = vmatprep.mubr.bf16.mxu0 0
        %433 = vmatmul.mubr.bf16.gmra.mrb[0].mxu0 %v363
        %v434 = vpop.f32.mrb[0].mxu0
        %v435 = vadd.f32 0.0, %v434
        %v436 = vpop.f32.mrb[0].mxu0
        %v437 = vpop.f32.mrb[0].mxu0
        %v438 = vadd.f32 0.0, %v437
        %v439 = vpop.f32.mrb[0].mxu0
        %440 = vmatprep.mubr.bf16.mxu0 0
        %441 = vmatmul.mubr.bf16.gmra.mrb[0].mxu0 %v364
        %v442 = vpop.f32.mrb[0].mxu0
        %v443 = vadd.f32 0.0, %v442
        %v444 = vpop.f32.mrb[0].mxu0
        %v445 = vpop.f32.mrb[0].mxu0
        %v446 = vadd.f32 0.0, %v445
        %v447 = vpop.f32.mrb[0].mxu0
        %448 = vmatprep.mubr.bf16.mxu0 0
        %449 = vmatmul.mubr.bf16.gmra.mrb[0].mxu0 %v365
        %v450 = vpop.f32.mrb[0].mxu0
        %v451 = vadd.f32 0.0, %v450
        %v452 = vpop.f32.mrb[0].mxu0
        %v453 = vpop.f32.mrb[0].mxu0
        %v454 = vadd.f32 0.0, %v453
        %v455 = vpop.f32.mrb[0].mxu0
        %456 = vmatprep.mubr.bf16.mxu0 0
        %457 = vmatmul.mubr.bf16.gmra.mrb[0].mxu0 %v366
        %v458 = vpop.f32.mrb[0].mxu0
        %v459 = vadd.f32 0.0, %v458
        %v460 = vpop.f32.mrb[0].mxu0
        %v461 = vpop.f32.mrb[0].mxu0
        %v462 = vadd.f32 0.0, %v461
        %v463 = vpop.f32.mrb[0].mxu0
        %464 = vmatprep.mubr.bf16.mxu0 0
        %465 = vmatmul.mubr.bf16.gmra.mrb[0].mxu0 %v367
        %v466 = vpop.f32.mrb[0].mxu0
        %v467 = vadd.f32 0.0, %v466
        %v468 = vpop.f32.mrb[0].mxu0
        %v469 = vpop.f32.mrb[0].mxu0
        %v470 = vadd.f32 0.0, %v469
        %v471 = vpop.f32.mrb[0].mxu0
        %472 = vdwg.mxu0
        %v473 = vadd.f32 %v296, %v411
        %v474 = vadd.f32 %v297, %v414
        %v475 = vadd.f32 %v298, %v419
        %v476 = vadd.f32 %v299, %v422
        %v477 = vadd.f32 %v300, %v427
        %v478 = vadd.f32 %v301, %v430
        %v479 = vadd.f32 %v302, %v435
        %v480 = vadd.f32 %v303, %v438
        %v481 = vadd.f32 %v304, %v443
        %v482 = vadd.f32 %v305, %v446
        %v483 = vadd.f32 %v306, %v451
        %v484 = vadd.f32 %v307, %v454
        %v485 = vadd.f32 %v308, %v459
        %v486 = vadd.f32 %v309, %v462
        %v487 = vadd.f32 %v310, %v467
        %v488 = vadd.f32 %v311, %v470
        %489 = vst [vmem:[#allocation5] sm:$0xff] %v473
        %490 = vst [vmem:[#allocation5 + $0x8] sm:$0xff] %v474
        %491 = vst [vmem:[#allocation5 + $0x10] sm:$0xff] %v475
        %492 = vst [vmem:[#allocation5 + $0x18] sm:$0xff] %v476
        %493 = vst [vmem:[#allocation5 + $0x20] sm:$0xff] %v477
        %494 = vst [vmem:[#allocation5 + $0x28] sm:$0xff] %v478
        %495 = vst [vmem:[#allocation5 + $0x30] sm:$0xff] %v479
        %496 = vst [vmem:[#allocation5 + $0x38] sm:$0xff] %v480
        %497 = vst [vmem:[#allocation5 + $0x40] sm:$0xff] %v481
        %498 = vst [vmem:[#allocation5 + $0x48] sm:$0xff] %v482
        %499 = vst [vmem:[#allocation5 + $0x50] sm:$0xff] %v483
        %500 = vst [vmem:[#allocation5 + $0x58] sm:$0xff] %v484
        %501 = vst [vmem:[#allocation5 + $0x60] sm:$0xff] %v485
        %502 = vst [vmem:[#allocation5 + $0x68] sm:$0xff] %v486
        %503 = vst [vmem:[#allocation5 + $0x70] sm:$0xff] %v487
        %504 = vst [vmem:[#allocation5 + $0x78] sm:$0xff] %v488
        %p505 = scmp.ne.s32.totalorder %s21, 2
        %s506 = smul.u32 %s22, 128
        %p507 = pnand %p182, %p260
        %p508 = pneg %p507
        %p509 = pnand %p508, %p505
        %p510 = pneg %p509
        // Predicated region
        $region45: #{tpu_custom_call.1} parent=27 // pred_check
          _
        $region46: #{tpu_custom_call.1} parent=27 // pred_check_branch
          %512 = sbr.rel (%p509) target = $region48
        $region47: #{tpu_custom_call.1} parent=27 // pred_region
          %v513 = vld [vmem:[#allocation5] sm:$0xff]
          %v514 = vld [vmem:[#allocation5 + $0x8] sm:$0xff]
          %v515 = vld [vmem:[#allocation5 + $0x10] sm:$0xff]
          %v516 = vld [vmem:[#allocation5 + $0x18] sm:$0xff]
          %v517 = vld [vmem:[#allocation5 + $0x20] sm:$0xff]
          %v518 = vld [vmem:[#allocation5 + $0x28] sm:$0xff]
          %v519 = vld [vmem:[#allocation5 + $0x30] sm:$0xff]
          %v520 = vld [vmem:[#allocation5 + $0x38] sm:$0xff]
          %v521 = vld [vmem:[#allocation5 + $0x40] sm:$0xff]
          %v522 = vld [vmem:[#allocation5 + $0x48] sm:$0xff]
          %v523 = vld [vmem:[#allocation5 + $0x50] sm:$0xff]
          %v524 = vld [vmem:[#allocation5 + $0x58] sm:$0xff]
          %v525 = vld [vmem:[#allocation5 + $0x60] sm:$0xff]
          %v526 = vld [vmem:[#allocation5 + $0x68] sm:$0xff]
          %v527 = vld [vmem:[#allocation5 + $0x70] sm:$0xff]
          %v528 = vld [vmem:[#allocation5 + $0x78] sm:$0xff]
          %v529 = vpack.c.bf16 %v514, %v513
          %v530 = vpack.c.bf16 %v516, %v515
          %v531 = vpack.c.bf16 %v518, %v517
          %v532 = vpack.c.bf16 %v520, %v519
          %v533 = vpack.c.bf16 %v522, %v521
          %v534 = vpack.c.bf16 %v524, %v523
          %v535 = vpack.c.bf16 %v526, %v525
          %v536 = vpack.c.bf16 %v528, %v527
          %s537 = sshra.s32 %s506, 4
          %s538 = sand.u32 %s506, 15
          %s539 = smul.addr %s537, 8
          %s540 = scalar_lea.vmem [#allocation3], %s539
          %541 = vst [vmem:[%s540] sm:$0xff] %v529
          %542 = vst [vmem:[%s540 + $0x8] sm:$0xff] %v530
          %543 = vst [vmem:[%s540 + $0x10] sm:$0xff] %v531
          %544 = vst [vmem:[%s540 + $0x18] sm:$0xff] %v532
          %545 = vst [vmem:[%s540 + $0x20] sm:$0xff] %v533
          %546 = vst [vmem:[%s540 + $0x28] sm:$0xff] %v534
          %547 = vst [vmem:[%s540 + $0x30] sm:$0xff] %v535
          %548 = vst [vmem:[%s540 + $0x38] sm:$0xff] %v536
        $region48: #{tpu_custom_call.1} parent=27 // pred_fallthru
          _
        %p549 = pnand %p182, %p261
        %p550 = pneg %p549
        %p551 = pnand %p550, %p505
        %p552 = pneg %p551
        // Predicated region
        $region49: #{tpu_custom_call.1} parent=27 // pred_check
          _
        $region50: #{tpu_custom_call.1} parent=27 // pred_check_branch
          %554 = sbr.rel (%p551) target = $region52
        $region51: #{tpu_custom_call.1} parent=27 // pred_region
          %v555 = vld [vmem:[#allocation5] sm:$0xff]
          %v556 = vld [vmem:[#allocation5 + $0x8] sm:$0xff]
          %v557 = vld [vmem:[#allocation5 + $0x10] sm:$0xff]
          %v558 = vld [vmem:[#allocation5 + $0x18] sm:$0xff]
          %v559 = vld [vmem:[#allocation5 + $0x20] sm:$0xff]
          %v560 = vld [vmem:[#allocation5 + $0x28] sm:$0xff]
          %v561 = vld [vmem:[#allocation5 + $0x30] sm:$0xff]
          %v562 = vld [vmem:[#allocation5 + $0x38] sm:$0xff]
          %v563 = vld [vmem:[#allocation5 + $0x40] sm:$0xff]
          %v564 = vld [vmem:[#allocation5 + $0x48] sm:$0xff]
          %v565 = vld [vmem:[#allocation5 + $0x50] sm:$0xff]
          %v566 = vld [vmem:[#allocation5 + $0x58] sm:$0xff]
          %v567 = vld [vmem:[#allocation5 + $0x60] sm:$0xff]
          %v568 = vld [vmem:[#allocation5 + $0x68] sm:$0xff]
          %v569 = vld [vmem:[#allocation5 + $0x70] sm:$0xff]
          %v570 = vld [vmem:[#allocation5 + $0x78] sm:$0xff]
          %v571 = vpack.c.bf16 %v556, %v555
          %v572 = vpack.c.bf16 %v558, %v557
          %v573 = vpack.c.bf16 %v560, %v559
          %v574 = vpack.c.bf16 %v562, %v561
          %v575 = vpack.c.bf16 %v564, %v563
          %v576 = vpack.c.bf16 %v566, %v565
          %v577 = vpack.c.bf16 %v568, %v567
          %v578 = vpack.c.bf16 %v570, %v569
          %s579 = sshra.s32 %s506, 4
          %s580 = sand.u32 %s506, 15
          %s581 = smul.addr %s579, 8
          %s582 = scalar_lea.vmem [#allocation2], %s581
          %583 = vst [vmem:[%s582] sm:$0xff] %v571
          %584 = vst [vmem:[%s582 + $0x8] sm:$0xff] %v572
          %585 = vst [vmem:[%s582 + $0x10] sm:$0xff] %v573
          %586 = vst [vmem:[%s582 + $0x18] sm:$0xff] %v574
          %587 = vst [vmem:[%s582 + $0x20] sm:$0xff] %v575
          %588 = vst [vmem:[%s582 + $0x28] sm:$0xff] %v576
          %589 = vst [vmem:[%s582 + $0x30] sm:$0xff] %v577
          %590 = vst [vmem:[%s582 + $0x38] sm:$0xff] %v578
        $region52: #{tpu_custom_call.1} parent=27 // pred_fallthru
          _
        // Predicated region
        $region53: #{tpu_custom_call.1} parent=27 // pred_check
          %p591 = pneg %p182
        $region54: #{tpu_custom_call.1} parent=27 // pred_check_branch
          %593 = sbr.rel (%p591) target = $region56
        $region55: #{tpu_custom_call.1} parent=27 // pred_region
          %s594 = scalar_lea.vmem [#allocation4], %s506
          %v595 = vld [vmem:[%s594] sm:$0xff]
          %v596 = vld [vmem:[%s594 + $0x8] sm:$0xff]
          %v597 = vld [vmem:[%s594 + $0x10] sm:$0xff]
          %v598 = vld [vmem:[%s594 + $0x18] sm:$0xff]
          %v599 = vld [vmem:[%s594 + $0x20] sm:$0xff]
          %v600 = vld [vmem:[%s594 + $0x28] sm:$0xff]
          %v601 = vld [vmem:[%s594 + $0x30] sm:$0xff]
          %v602 = vld [vmem:[%s594 + $0x38] sm:$0xff]
          %v603 = vld [vmem:[%s594 + $0x40] sm:$0xff]
          %v604 = vld [vmem:[%s594 + $0x48] sm:$0xff]
          %v605 = vld [vmem:[%s594 + $0x50] sm:$0xff]
          %v606 = vld [vmem:[%s594 + $0x58] sm:$0xff]
          %v607 = vld [vmem:[%s594 + $0x60] sm:$0xff]
          %v608 = vld [vmem:[%s594 + $0x68] sm:$0xff]
          %v609 = vld [vmem:[%s594 + $0x70] sm:$0xff]
          %v610 = vld [vmem:[%s594 + $0x78] sm:$0xff]
          %v611 = vld [vmem:[#allocation5] sm:$0xff]
          %v612 = vld [vmem:[#allocation5 + $0x8] sm:$0xff]
          %v613 = vld [vmem:[#allocation5 + $0x10] sm:$0xff]
          %v614 = vld [vmem:[#allocation5 + $0x18] sm:$0xff]
          %v615 = vld [vmem:[#allocation5 + $0x20] sm:$0xff]
          %v616 = vld [vmem:[#allocation5 + $0x28] sm:$0xff]
          %v617 = vld [vmem:[#allocation5 + $0x30] sm:$0xff]
          %v618 = vld [vmem:[#allocation5 + $0x38] sm:$0xff]
          %v619 = vld [vmem:[#allocation5 + $0x40] sm:$0xff]
          %v620 = vld [vmem:[#allocation5 + $0x48] sm:$0xff]
          %v621 = vld [vmem:[#allocation5 + $0x50] sm:$0xff]
          %v622 = vld [vmem:[#allocation5 + $0x58] sm:$0xff]
          %v623 = vld [vmem:[#allocation5 + $0x60] sm:$0xff]
          %v624 = vld [vmem:[#allocation5 + $0x68] sm:$0xff]
          %v625 = vld [vmem:[#allocation5 + $0x70] sm:$0xff]
          %v626 = vld [vmem:[#allocation5 + $0x78] sm:$0xff]
          %v627 = vadd.f32 %v595, %v611
          %v628 = vadd.f32 %v596, %v612
          %v629 = vadd.f32 %v597, %v613
          %v630 = vadd.f32 %v598, %v614
          %v631 = vadd.f32 %v599, %v615
          %v632 = vadd.f32 %v600, %v616
          %v633 = vadd.f32 %v601, %v617
          %v634 = vadd.f32 %v602, %v618
          %v635 = vadd.f32 %v603, %v619
          %v636 = vadd.f32 %v604, %v620
          %v637 = vadd.f32 %v605, %v621
          %v638 = vadd.f32 %v606, %v622
          %v639 = vadd.f32 %v607, %v623
          %v640 = vadd.f32 %v608, %v624
          %v641 = vadd.f32 %v609, %v625
          %v642 = vadd.f32 %v610, %v626
          %643 = vst [vmem:[%s594] sm:$0xff] %v627
          %644 = vst [vmem:[%s594 + $0x8] sm:$0xff] %v628
          %645 = vst [vmem:[%s594 + $0x10] sm:$0xff] %v629
          %646 = vst [vmem:[%s594 + $0x18] sm:$0xff] %v630
          %647 = vst [vmem:[%s594 + $0x20] sm:$0xff] %v631
          %648 = vst [vmem:[%s594 + $0x28] sm:$0xff] %v632
          %649 = vst [vmem:[%s594 + $0x30] sm:$0xff] %v633
          %650 = vst [vmem:[%s594 + $0x38] sm:$0xff] %v634
          %651 = vst [vmem:[%s594 + $0x40] sm:$0xff] %v635
          %652 = vst [vmem:[%s594 + $0x48] sm:$0xff] %v636
          %653 = vst [vmem:[%s594 + $0x50] sm:$0xff] %v637
          %654 = vst [vmem:[%s594 + $0x58] sm:$0xff] %v638
          %655 = vst [vmem:[%s594 + $0x60] sm:$0xff] %v639
          %656 = vst [vmem:[%s594 + $0x68] sm:$0xff] %v640
          %657 = vst [vmem:[%s594 + $0x70] sm:$0xff] %v641
          %658 = vst [vmem:[%s594 + $0x78] sm:$0xff] %v642
          %v659 = vmul.f32 %v627, 0.25
          %v660 = vmul.f32 %v628, 0.25
          %v661 = vmul.f32 %v629, 0.25
          %v662 = vmul.f32 %v630, 0.25
          %v663 = vmul.f32 %v631, 0.25
          %v664 = vmul.f32 %v632, 0.25
          %v665 = vmul.f32 %v633, 0.25
          %v666 = vmul.f32 %v634, 0.25
          %v667 = vmul.f32 %v635, 0.25
          %v668 = vmul.f32 %v636, 0.25
          %v669 = vmul.f32 %v637, 0.25
          %v670 = vmul.f32 %v638, 0.25
          %v671 = vmul.f32 %v639, 0.25
          %v672 = vmul.f32 %v640, 0.25
          %v673 = vmul.f32 %v641, 0.25
          %v674 = vmul.f32 %v642, 0.25
          %675 = vst [vmem:[#allocation11] sm:$0xff] %v659
          %676 = vst [vmem:[#allocation11 + $0x8] sm:$0xff] %v660
          %677 = vst [vmem:[#allocation11 + $0x10] sm:$0xff] %v661
          %678 = vst [vmem:[#allocation11 + $0x18] sm:$0xff] %v662
          %679 = vst [vmem:[#allocation11 + $0x20] sm:$0xff] %v663
          %680 = vst [vmem:[#allocation11 + $0x28] sm:$0xff] %v664
          %681 = vst [vmem:[#allocation11 + $0x30] sm:$0xff] %v665
          %682 = vst [vmem:[#allocation11 + $0x38] sm:$0xff] %v666
          %683 = vst [vmem:[#allocation11 + $0x40] sm:$0xff] %v667
          %684 = vst [vmem:[#allocation11 + $0x48] sm:$0xff] %v668
          %685 = vst [vmem:[#allocation11 + $0x50] sm:$0xff] %v669
          %686 = vst [vmem:[#allocation11 + $0x58] sm:$0xff] %v670
          %687 = vst [vmem:[#allocation11 + $0x60] sm:$0xff] %v671
          %688 = vst [vmem:[#allocation11 + $0x68] sm:$0xff] %v672
          %689 = vst [vmem:[#allocation11 + $0x70] sm:$0xff] %v673
          %690 = vst [vmem:[#allocation11 + $0x78] sm:$0xff] %v674
        $region56: #{tpu_custom_call.1} parent=27 // pred_fallthru
          _
        // Predicated region
        $region57: #{tpu_custom_call.1} parent=27 // pred_check
          %p691 = pneg %p102
        $region58: #{tpu_custom_call.1} parent=27 // pred_check_branch
          %693 = sbr.rel (%p691) target = $region60
        $region59: #{tpu_custom_call.1} parent=27 // pred_region
          %s694 = smul.u32 16, %s22
          %s696 = ssub.s32 2048, 2048
          %697 = vsyncadd [#allocation8], %s696
          %s698 = smul.addr %s694, 128
          %s699 = scalar_lea.hbm %s2, %s698
          %s700 = sshll.u32 [#allocation11], 4
          %s701 = int_to_ptr.vmem [resolvable:$true] %s700
          %706 = dma.vmem_to_hbm [thread:$0]  %s701, 2048, %s699, [#allocation8], 128, 128, 8
        $region60: #{tpu_custom_call.1} parent=27 // pred_fallthru
          _
        // Predicated region
        $region61: #{tpu_custom_call.1} parent=27 // pred_check
          %p707 = pneg %p102
        $region62: #{tpu_custom_call.1} parent=27 // pred_check_branch
          %709 = sbr.rel (%p707) target = $region64
        $region63: #{tpu_custom_call.1} parent=27 // pred_region
          %710 = dma.done [#allocation8], 2048
        $region64: #{tpu_custom_call.1} parent=27 // pred_fallthru
          _
      $region28: #{tpu_custom_call.1} parent=5 // pred_fallthru
        _
      %p711 = scmp.le.s32.totalorder 2, %s11
      // Predicated region
      $region65: #{tpu_custom_call.1} parent=5 // pred_check
        %p712 = pneg %p711
      $region66: #{tpu_custom_call.1} parent=5 // pred_check_branch
        %714 = sbr.rel (%p712) target = $region68
      $region67: #{tpu_custom_call.1} parent=5 // pred_region
        %s715 = ssub.s32 %s11, 2
      $region68: #{tpu_custom_call.1} parent=5 // pred_fallthru
        _
    $region6: #{tpu_custom_call.1} parent=1 // loop_footer
      %s15 = sadd.s32 1, %s11
    $region7: #{tpu_custom_call.1} parent=1 // loop_footer_branch
      %10 = sbr.rel target = $region3
    $region8: #{tpu_custom_call.1} parent=1 // loop_exit
      _
    %716 = vsyncpa [#allocation7], 1
    %s717 = scalar_lea.sflag [#allocation7], 1
    %718 = vsyncpa %s717, 1
    %719 = vsyncpa [#allocation10], 1
    %720 = vsyncpa [#allocation8], 1
    %s721 = scalar_lea.sflag [#allocation8], 1
    %722 = vsyncpa %s721, 1

</llo_original>
